<compile_context>
chip_gen: v7x
topology: tpu7x:2x2x1
jax: 0.10.0
libtpu: 0.0.40
codegen_flags: <defaults>
</compile_context>

<pallas_src>
import functools

import jax
import jax.numpy as jnp
from jax.experimental import pallas as pl
from jax.experimental.pallas import tpu as pltpu


def _emd_kernel(in_ref, tg_ref, out_ref, *, tile_k: int):
    """One (TN, K) row tile: sum of squared cumsum diffs -> out block [0, 0, 0]."""
    tn, k = in_ref.shape
    n_k_tiles = k // tile_k

    # Block-local upper-triangular ones (incl. diagonal), built on the VPU:
    # (d @ tri)[n, t] == sum_{j <= t} d[n, j] within the K tile.
    row = jax.lax.broadcasted_iota(jnp.int32, (tile_k, tile_k), 0)
    col = jax.lax.broadcasted_iota(jnp.int32, (tile_k, tile_k), 1)
    tri = (row <= col).astype(jnp.float32)

    carry = jnp.zeros((tn, 1), jnp.float32)      # per-row running cumsum of d
    acc = jnp.zeros((tn, tile_k), jnp.float32)   # elementwise sum of c*c

    for j in range(n_k_tiles):                   # static, small trip count
        lo = j * tile_k
        d = (in_ref[:, lo:lo + tile_k].astype(jnp.float32)
             - tg_ref[:, lo:lo + tile_k].astype(jnp.float32))
        c = jnp.dot(d, tri, preferred_element_type=jnp.float32,
                    precision=jax.lax.Precision.HIGHEST) + carry
        acc = acc + c * c
        if j + 1 < n_k_tiles:
            carry = c[:, tile_k - 1:tile_k]      # running cumsum for next K tile

    # Single cross-lane reduce per row tile; partial lands in slot [0,0] of an
    # (8,128)-tiled output block (rest zeroed). Wrapper sums all partials.
    s = jnp.sum(acc)
    sub = jax.lax.broadcasted_iota(jnp.int32, (8, 128), 0)
    lane = jax.lax.broadcasted_iota(jnp.int32, (8, 128), 1)
    out_ref[0] = jnp.where((sub == 0) & (lane == 0), s, 0.0)


def _round_up(x, m):
    return (x + m - 1) // m * m


def earth_mover_distance_loss(inp, tgt, *, tile_n=None, tile_k=None):
    """MSE(cumsum(inp, axis=1), cumsum(tgt, axis=1)) == EarthMoverDisteLoss.forward."""
    assert inp.shape == tgt.shape and inp.ndim == 2
    N, K = inp.shape

    # K tile: MXU-aligned when K allows it, otherwise the whole K in one tile
    # (zero-padding K would corrupt the cumsum, so only exact divisors are tiled).
    if tile_k is None:
        if K % 256 == 0:
            tile_k = 256
        elif K % 128 == 0:
            tile_k = 128
        else:
            tile_k = K
    assert K % tile_k == 0

    # Row tile: multiple of 8 sublanes, sized so each (tile_n, K) f32 input block
    # stays ~2 MiB (x2 inputs x2 pipeline buffers ~ 8 MiB of VMEM -> portable to
    # v7x's 64 MiB VMEM and under every chip's default scoped limit).
    if tile_n is None:
        budget_rows = max(8, (2 * 1024 * 1024) // (4 * K))
        tile_n = min(512, (budget_rows // 8) * 8)
        tile_n = max(8, min(tile_n, _round_up(N, 8)))

    # Pad N with zero rows: they contribute exactly 0 to the squared cumsum diff.
    n_padded = _round_up(N, tile_n)
    if n_padded != N:
        inp = jnp.pad(inp, ((0, n_padded - N), (0, 0)))
        tgt = jnp.pad(tgt, ((0, n_padded - N), (0, 0)))
    n_tiles = n_padded // tile_n

    partials = pl.pallas_call(
        functools.partial(_emd_kernel, tile_k=tile_k),
        out_shape=jax.ShapeDtypeStruct((n_tiles, 8, 128), jnp.float32),
        grid=(n_tiles,),
        in_specs=[
            pl.BlockSpec((tile_n, K), lambda i: (i, 0)),
            pl.BlockSpec((tile_n, K), lambda i: (i, 0)),
        ],
        out_specs=pl.BlockSpec((1, 8, 128), lambda i: (i, 0, 0)),
        compiler_params=pltpu.CompilerParams(
            dimension_semantics=("parallel",),   # row tiles are independent
            vmem_limit_bytes=32 * 1024 * 1024,
        ),
    )(inp, tgt)

    # Mean over the original N*K elements (nn.MSELoss default reduction='mean').
    return jnp.sum(partials) / jnp.float32(N * K)


if __name__ == "__main__":
    key = jax.random.PRNGKey(0)
    k1, k2 = jax.random.split(key)

    # Small (N, K) histogram shapes, lane/MXU-aligned K.
    N, K = 64, 128
    x = jax.nn.softmax(jax.random.normal(k1, (N, K), dtype=jnp.float32), axis=1)
    y = jax.nn.softmax(jax.random.normal(k2, (N, K), dtype=jnp.float32), axis=1)

    loss = jax.jit(earth_mover_distance_loss)(x, y)
    loss = jax.block_until_ready(loss)

    # Pure-JAX reference for sanity check.
    ref = jnp.mean((jnp.cumsum(x, axis=1) - jnp.cumsum(y, axis=1)) ** 2)
    assert jnp.allclose(loss, ref, rtol=1e-5, atol=1e-7), (loss, ref)

    print("KERNEL_OK")
</pallas_src>

<mosaic_0001>
module attributes {stable_mosaic.version = 11 : i64} {
  func.func @_emd_kernel(%arg0: i32, %arg1: memref<64x128xf32, #tpu.memory_space<vmem>>, %arg2: memref<64x128xf32, #tpu.memory_space<vmem>>, %arg3: memref<1x8x128xf32, #tpu.memory_space<vmem>>) attributes {dimension_semantics = [#tpu.dimension_semantics<parallel>], iteration_bounds = array<i64: 1>, scalar_prefetch = 0 : i64, scratch_operands = 0 : i64, tpu.core_type = #tpu.core_type<tc>, window_params = [{transform_indices = @transform_0, window_bounds = array<i64: 64, 128>}, {transform_indices = @transform_1, window_bounds = array<i64: 64, 128>}, {transform_indices = @transform_2, window_bounds = array<i64: 1, 8, 128>}]} {
    %0 = tpu.iota {dimensions = array<i32: 0>} : vector<128x128xi32>
    %1 = tpu.iota {dimensions = array<i32: 1>} : vector<128x128xi32>
    %2 = arith.cmpi sle, %0, %1 : vector<128x128xi32>
    %3 = arith.extui %2 : vector<128x128xi1> to vector<128x128xi32>
    %4 = arith.sitofp %3 : vector<128x128xi32> to vector<128x128xf32>
    %cst = arith.constant 0.000000e+00 : f32
    %5 = vector.broadcast %cst : f32 to vector<64x1xf32>
    %cst_0 = arith.constant 0.000000e+00 : f32
    %6 = vector.broadcast %cst_0 : f32 to vector<64x128xf32>
    %c0 = arith.constant 0 : index
    %c0_1 = arith.constant 0 : index
    %7 = vector.load %arg1[%c0, %c0_1] : memref<64x128xf32, #tpu.memory_space<vmem>>, vector<64x128xf32>
    %c0_2 = arith.constant 0 : index
    %c0_3 = arith.constant 0 : index
    %8 = vector.load %arg2[%c0_2, %c0_3] : memref<64x128xf32, #tpu.memory_space<vmem>>, vector<64x128xf32>
    %9 = arith.subf %7, %8 : vector<64x128xf32>
    %cst_4 = arith.constant dense<0.000000e+00> : vector<64x128xf32>
    %10 = tpu.matmul %9, %4, %cst_4 {dimension_numbers = #tpu.dot_dimension_numbers<[1], [0], [0], [1], [0, 0, 1, 1], [], []>, precision = #tpu.contract_precision<fp32>} : vector<64x128xf32>, vector<128x128xf32>, vector<64x128xf32> -> vector<64x128xf32>
    %11 = vector.broadcast %5 : vector<64x1xf32> to vector<64x128xf32>
    %12 = arith.addf %10, %11 : vector<64x128xf32>
    %13 = arith.mulf %12, %12 : vector<64x128xf32>
    %14 = arith.addf %6, %13 : vector<64x128xf32>
    %15 = vector.shape_cast %14 : vector<64x128xf32> to vector<1x64x128xf32>
    %cst_5 = arith.constant dense<0.000000e+00> : vector<1xf32>
    %16 = vector.multi_reduction <add>, %15, %cst_5 [1, 2] : vector<1x64x128xf32> to vector<1xf32>
    %17 = vector.shape_cast %16 : vector<1xf32> to vector<1x1x1xf32>
    %18 = vector.extract %17[0, 0, 0] : f32 from vector<1x1x1xf32>
    %19 = tpu.iota {dimensions = array<i32: 0>} : vector<8x128xi32>
    %20 = tpu.iota {dimensions = array<i32: 1>} : vector<8x128xi32>
    %c0_i32 = arith.constant 0 : i32
    %21 = vector.broadcast %c0_i32 : i32 to vector<8x128xi32>
    %22 = arith.cmpi eq, %19, %21 : vector<8x128xi32>
    %c0_i32_6 = arith.constant 0 : i32
    %23 = vector.broadcast %c0_i32_6 : i32 to vector<8x128xi32>
    %24 = arith.cmpi eq, %20, %23 : vector<8x128xi32>
    %25 = arith.andi %22, %24 : vector<8x128xi1>
    %cst_7 = arith.constant 0.000000e+00 : f32
    %26 = vector.broadcast %18 : f32 to vector<8x128xf32>
    %27 = vector.broadcast %cst_7 : f32 to vector<8x128xf32>
    %28 = arith.select %25, %26, %27 : vector<8x128xi1>, vector<8x128xf32>
    %c0_8 = arith.constant 0 : index
    %c0_9 = arith.constant 0 : index
    %c0_10 = arith.constant 0 : index
    %29 = vector.load %arg3[%c0_8, %c0_9, %c0_10] : memref<1x8x128xf32, #tpu.memory_space<vmem>>, vector<1x8x128xf32>
    %30 = vector.shape_cast %29 : vector<1x8x128xf32> to vector<8x128xf32>
    %31 = vector.shape_cast %28 : vector<8x128xf32> to vector<1x8x128xf32>
    tpu.vector_store %arg3[%c0_8, %c0_9, %c0_10], %31 {strides = array<i32>} : memref<1x8x128xf32, #tpu.memory_space<vmem>>, vector<1x8x128xf32>,
    return
  }
  func.func @transform_0(%arg0: i32) -> (i32, i32) {
    %c0_i32 = arith.constant 0 : i32
    %c0_i32_0 = arith.constant 0 : i32
    return %arg0, %c0_i32 : i32, i32
  }
  func.func @transform_1(%arg0: i32) -> (i32, i32) {
    %c0_i32 = arith.constant 0 : i32
    %c0_i32_0 = arith.constant 0 : i32
    return %arg0, %c0_i32 : i32, i32
  }
  func.func @transform_2(%arg0: i32) -> (i32, i32, i32) {
    %c0_i32 = arith.constant 0 : i32
    %c0_i32_0 = arith.constant 0 : i32
    %c0_i32_1 = arith.constant 0 : i32
    return %arg0, %c0_i32, %c0_i32_0 : i32, i32, i32
  }
}

</mosaic_0001>

<llo_original>
// kernel: earth_mover_distance_loss.1
$region0: #{earth_mover_distance_loss.1}
  #allocation0 [shape = 'u32[]', space=smem, size = 0x4, offset = 0x4, fixed_abs, tag = 'smem constant byte address 0x4 - core index']
  #allocation1 [shape = 'u32[144,128]{1,0:T(1,128)}', space=vmem, size = 0x12000, scoped, tag = 'internal scratch']
  %s0 = inlined_call_operand.hbm [shape: f32[64,128], index: 0, kind: input, shape index: {}]
  %s1 = inlined_call_operand.hbm [shape: f32[64,128], index: 1, kind: input, shape index: {}]
  %s2 = inlined_call_operand.vmem [shape: f32[1,8,128], index: 2, kind: output, shape index: {}]
  %s3 = sld [smem:[#allocation0]]
  $region26: #{earth_mover_distance_loss.1} parent=0
    _
  %s5 = ssub.s32 1, %s3
  %s6 = scalar_select 0, %s5, %s3
  $region1: #{earth_mover_distance_loss.1} parent=0
    #allocation2 [shape = 'u8[32768]{0}', space=vmem, size = 0x8000, scoped, tag = 'input window, operand 0, single buffered']
    #allocation3 [shape = 's32[1]{0}', space=sflag, size = 0x4, scoped, tag = 'scoped memory for earth_mover_distance_loss.1']
    #allocation4 [shape = 'u8[32768]{0}', space=vmem, size = 0x8000, scoped, tag = 'input window, operand 1, single buffered']
    #allocation5 [shape = 's32[1]{0}', space=sflag, size = 0x4, scoped, tag = 'scoped memory for earth_mover_distance_loss.1']
    %7 = vsyncpa [#allocation3], 0
    %8 = vsyncpa [#allocation5], 0
    // Predicated region
    $region2: #{earth_mover_distance_loss.1} parent=1 // pred_check
      _
    $region3: #{earth_mover_distance_loss.1} parent=1 // pred_check_branch
      %10 = sbr.rel (0) target = $region5
    $region4: #{earth_mover_distance_loss.1} parent=1 // pred_region
      %s12 = ssub.s32 1024, 1024
      %13 = vsyncadd [#allocation3], %s12
      %s14 = sshll.u32 [#allocation2], 4
      %s15 = int_to_ptr.vmem [resolvable:$true] %s14
      %20 = dma.hbm_to_vmem [thread:$0]  %s0, 1024, %s15, [#allocation3], 128, 128, 8
    $region5: #{earth_mover_distance_loss.1} parent=1 // pred_fallthru
      _
    // Predicated region
    $region6: #{earth_mover_distance_loss.1} parent=1 // pred_check
      _
    $region7: #{earth_mover_distance_loss.1} parent=1 // pred_check_branch
      %22 = sbr.rel (0) target = $region9
    $region8: #{earth_mover_distance_loss.1} parent=1 // pred_region
      %s24 = ssub.s32 1024, 1024
      %25 = vsyncadd [#allocation5], %s24
      %s26 = sshll.u32 [#allocation4], 4
      %s27 = int_to_ptr.vmem [resolvable:$true] %s26
      %32 = dma.hbm_to_vmem [thread:$0]  %s1, 1024, %s27, [#allocation5], 128, 128, 8
    $region9: #{earth_mover_distance_loss.1} parent=1 // pred_fallthru
      _
    // Predicated region
    $region10: #{earth_mover_distance_loss.1} parent=1 // pred_check
      _
    $region11: #{earth_mover_distance_loss.1} parent=1 // pred_check_branch
      %34 = sbr.rel (0) target = $region13
    $region12: #{earth_mover_distance_loss.1} parent=1 // pred_region
      %35 = dma.done [#allocation3], 1024
    $region13: #{earth_mover_distance_loss.1} parent=1 // pred_fallthru
      _
    // Predicated region
    $region14: #{earth_mover_distance_loss.1} parent=1 // pred_check
      _
    $region15: #{earth_mover_distance_loss.1} parent=1 // pred_check_branch
      %37 = sbr.rel (0) target = $region17
    $region16: #{earth_mover_distance_loss.1} parent=1 // pred_region
      %38 = dma.done [#allocation5], 1024
    $region17: #{earth_mover_distance_loss.1} parent=1 // pred_fallthru
      _
    %v39 = vlaneseq
    %v40 = vshrl.u32 %v39, 7
    %v41 = vadd.s32 %v40, 8
    %v42 = vadd.s32 %v40, 16
    %v43 = vadd.s32 %v40, 24
    %v44 = vadd.s32 %v40, 32
    %v45 = vadd.s32 %v40, 40
    %v46 = vadd.s32 %v40, 48
    %v47 = vadd.s32 %v40, 56
    %v48 = vadd.s32 %v40, 64
    %v49 = vadd.s32 %v40, 72
    %v50 = vadd.s32 %v40, 80
    %v51 = vadd.s32 %v40, 88
    %v52 = vadd.s32 %v40, 96
    %v53 = vadd.s32 %v40, 104
    %v54 = vadd.s32 %v40, 112
    %v55 = vadd.s32 %v40, 120
    %v56 = vlaneseq
    %v57 = vand.u32 %v56, 127
    %vm58 = vcmp.le.s32.totalorder %v40, %v57
    %vm59 = vcmp.le.s32.totalorder %v41, %v57
    %vm60 = vcmp.le.s32.totalorder %v42, %v57
    %vm61 = vcmp.le.s32.totalorder %v43, %v57
    %vm62 = vcmp.le.s32.totalorder %v44, %v57
    %vm63 = vcmp.le.s32.totalorder %v45, %v57
    %vm64 = vcmp.le.s32.totalorder %v46, %v57
    %vm65 = vcmp.le.s32.totalorder %v47, %v57
    %vm66 = vcmp.le.s32.totalorder %v48, %v57
    %vm67 = vcmp.le.s32.totalorder %v49, %v57
    %vm68 = vcmp.le.s32.totalorder %v50, %v57
    %vm69 = vcmp.le.s32.totalorder %v51, %v57
    %vm70 = vcmp.le.s32.totalorder %v52, %v57
    %vm71 = vcmp.le.s32.totalorder %v53, %v57
    %vm72 = vcmp.le.s32.totalorder %v54, %v57
    %vm73 = vcmp.le.s32.totalorder %v55, %v57
    %v74 = vsel %vm58, 1, 0
    %v75 = vsel %vm59, 1, 0
    %v76 = vsel %vm60, 1, 0
    %v77 = vsel %vm61, 1, 0
    %v78 = vsel %vm62, 1, 0
    %v79 = vsel %vm63, 1, 0
    %v80 = vsel %vm64, 1, 0
    %v81 = vsel %vm65, 1, 0
    %v82 = vsel %vm66, 1, 0
    %v83 = vsel %vm67, 1, 0
    %v84 = vsel %vm68, 1, 0
    %v85 = vsel %vm69, 1, 0
    %v86 = vsel %vm70, 1, 0
    %v87 = vsel %vm71, 1, 0
    %v88 = vsel %vm72, 1, 0
    %v89 = vsel %vm73, 1, 0
    %v90 = vcvt.s32.f32 %v74
    %v91 = vcvt.s32.f32 %v75
    %v92 = vcvt.s32.f32 %v76
    %v93 = vcvt.s32.f32 %v77
    %v94 = vcvt.s32.f32 %v78
    %v95 = vcvt.s32.f32 %v79
    %v96 = vcvt.s32.f32 %v80
    %v97 = vcvt.s32.f32 %v81
    %v98 = vcvt.s32.f32 %v82
    %v99 = vcvt.s32.f32 %v83
    %v100 = vcvt.s32.f32 %v84
    %v101 = vcvt.s32.f32 %v85
    %v102 = vcvt.s32.f32 %v86
    %v103 = vcvt.s32.f32 %v87
    %v104 = vcvt.s32.f32 %v88
    %v105 = vcvt.s32.f32 %v89
    %v106 = vld [vmem:[#allocation2] sm:$0xff]
    %v107 = vld [vmem:[#allocation2 + $0x8] sm:$0xff]
    %v108 = vld [vmem:[#allocation2 + $0x10] sm:$0xff]
    %v109 = vld [vmem:[#allocation2 + $0x18] sm:$0xff]
    %v110 = vld [vmem:[#allocation2 + $0x20] sm:$0xff]
    %v111 = vld [vmem:[#allocation2 + $0x28] sm:$0xff]
    %v112 = vld [vmem:[#allocation2 + $0x30] sm:$0xff]
    %v113 = vld [vmem:[#allocation2 + $0x38] sm:$0xff]
    %v114 = vld [vmem:[#allocation4] sm:$0xff]
    %v115 = vld [vmem:[#allocation4 + $0x8] sm:$0xff]
    %v116 = vld [vmem:[#allocation4 + $0x10] sm:$0xff]
    %v117 = vld [vmem:[#allocation4 + $0x18] sm:$0xff]
    %v118 = vld [vmem:[#allocation4 + $0x20] sm:$0xff]
    %v119 = vld [vmem:[#allocation4 + $0x28] sm:$0xff]
    %v120 = vld [vmem:[#allocation4 + $0x30] sm:$0xff]
    %v121 = vld [vmem:[#allocation4 + $0x38] sm:$0xff]
    %v122 = vsub.f32 %v106, %v114
    %v123 = vsub.f32 %v107, %v115
    %v124 = vsub.f32 %v108, %v116
    %v125 = vsub.f32 %v109, %v117
    %v126 = vsub.f32 %v110, %v118
    %v127 = vsub.f32 %v111, %v119
    %v128 = vsub.f32 %v112, %v120
    %v129 = vsub.f32 %v113, %v121
    %130 = vmatprep.subr.mxu0 0.0
    %v131 = vand.u32 %v90, 4294901760
    %132 = vmatpush1.msra.mxu0 %v131
    %133 = vmatprep.subr.mxu0 0.0
    %v134 = vand.u32 %v91, 4294901760
    %135 = vmatpush1.msra.mxu0 %v134
    %136 = vmatprep.subr.mxu0 0.0
    %v137 = vand.u32 %v92, 4294901760
    %138 = vmatpush1.msra.mxu0 %v137
    %139 = vmatprep.subr.mxu0 0.0
    %v140 = vand.u32 %v93, 4294901760
    %141 = vmatpush1.msra.mxu0 %v140
    %142 = vmatprep.subr.mxu0 0.0
    %v143 = vand.u32 %v94, 4294901760
    %144 = vmatpush1.msra.mxu0 %v143
    %145 = vmatprep.subr.mxu0 0.0
    %v146 = vand.u32 %v95, 4294901760
    %147 = vmatpush1.msra.mxu0 %v146
    %148 = vmatprep.subr.mxu0 0.0
    %v149 = vand.u32 %v96, 4294901760
    %150 = vmatpush1.msra.mxu0 %v149
    %151 = vmatprep.subr.mxu0 0.0
    %v152 = vand.u32 %v97, 4294901760
    %153 = vmatpush1.msra.mxu0 %v152
    %154 = vmatprep.subr.mxu0 0.0
    %v155 = vand.u32 %v98, 4294901760
    %156 = vmatpush1.msra.mxu0 %v155
    %157 = vmatprep.subr.mxu0 0.0
    %v158 = vand.u32 %v99, 4294901760
    %159 = vmatpush1.msra.mxu0 %v158
    %160 = vmatprep.subr.mxu0 0.0
    %v161 = vand.u32 %v100, 4294901760
    %162 = vmatpush1.msra.mxu0 %v161
    %163 = vmatprep.subr.mxu0 0.0
    %v164 = vand.u32 %v101, 4294901760
    %165 = vmatpush1.msra.mxu0 %v164
    %166 = vmatprep.subr.mxu0 0.0
    %v167 = vand.u32 %v102, 4294901760
    %168 = vmatpush1.msra.mxu0 %v167
    %169 = vmatprep.subr.mxu0 0.0
    %v170 = vand.u32 %v103, 4294901760
    %171 = vmatpush1.msra.mxu0 %v170
    %172 = vmatprep.subr.mxu0 0.0
    %v173 = vand.u32 %v104, 4294901760
    %174 = vmatpush1.msra.mxu0 %v173
    %175 = vmatprep.subr.mxu0 0.0
    %v176 = vand.u32 %v105, 4294901760
    %177 = vmatpush1.msra.mxu0 %v176
    %178 = vmatprep.subr.mxu0 0.0
    %179 = vmatpush1.msra.mxu0 0.0
    %180 = vmatprep.subr.mxu0 0.0
    %181 = vmatpush1.msra.mxu0 0.0
    %182 = vmatprep.subr.mxu0 0.0
    %183 = vmatpush1.msra.mxu0 0.0
    %184 = vmatprep.subr.mxu0 0.0
    %185 = vmatpush1.msra.mxu0 0.0
    %186 = vmatprep.subr.mxu0 0.0
    %187 = vmatpush1.msra.mxu0 0.0
    %188 = vmatprep.subr.mxu0 0.0
    %189 = vmatpush1.msra.mxu0 0.0
    %190 = vmatprep.subr.mxu0 0.0
    %191 = vmatpush1.msra.mxu0 0.0
    %192 = vmatprep.subr.mxu0 0.0
    %193 = vmatpush1.msra.mxu0 0.0
    %194 = vmatprep.subr.mxu0 0.0
    %195 = vmatpush1.msra.mxu0 0.0
    %196 = vmatprep.subr.mxu0 0.0
    %197 = vmatpush1.msra.mxu0 0.0
    %198 = vmatprep.subr.mxu0 0.0
    %199 = vmatpush1.msra.mxu0 0.0
    %200 = vmatprep.subr.mxu0 0.0
    %201 = vmatpush1.msra.mxu0 0.0
    %202 = vmatprep.subr.mxu0 0.0
    %203 = vmatpush1.msra.mxu0 0.0
    %204 = vmatprep.subr.mxu0 0.0
    %205 = vmatpush1.msra.mxu0 0.0
    %206 = vmatprep.subr.mxu0 0.0
    %207 = vmatpush1.msra.mxu0 0.0
    %208 = vmatprep.subr.mxu0 0.0
    %209 = vmatpush1.msra.mxu0 0.0
    %210 = vmatprep.mubr.f32.mxu0 0.0
    %v211 = vand.u32 %v122, 4294901760
    %v212 = vsub.f32 %v122, %v211
    %v213 = vand.u32 %v212, 4294901760
    %v214 = vsub.f32 %v212, %v213
    %v215 = vand.u32 %v214, 4294901760
    %216 = vmatmul.mubr.f32.gmra.mrb[0].mxu0 %v215
    %v217 = vpop.f32.mrb[0].mxu0
    %v218 = vadd.f32 0.0, %v217
    %v219 = vpop.f32.mrb[0].mxu0
    %220 = vmatprep.mubr.f32.mxu0 0.0
    %v221 = vand.u32 %v123, 4294901760
    %v222 = vsub.f32 %v123, %v221
    %v223 = vand.u32 %v222, 4294901760
    %v224 = vsub.f32 %v222, %v223
    %v225 = vand.u32 %v224, 4294901760
    %226 = vmatmul.mubr.f32.gmra.mrb[0].mxu0 %v225
    %v227 = vpop.f32.mrb[0].mxu0
    %v228 = vadd.f32 0.0, %v227
    %v229 = vpop.f32.mrb[0].mxu0
    %230 = vmatprep.mubr.f32.mxu0 0.0
    %v231 = vand.u32 %v124, 4294901760
    %v232 = vsub.f32 %v124, %v231
    %v233 = vand.u32 %v232, 4294901760
    %v234 = vsub.f32 %v232, %v233
    %v235 = vand.u32 %v234, 4294901760
    %236 = vmatmul.mubr.f32.gmra.mrb[0].mxu0 %v235
    %v237 = vpop.f32.mrb[0].mxu0
    %v238 = vadd.f32 0.0, %v237
    %v239 = vpop.f32.mrb[0].mxu0
    %240 = vmatprep.mubr.f32.mxu0 0.0
    %v241 = vand.u32 %v125, 4294901760
    %v242 = vsub.f32 %v125, %v241
    %v243 = vand.u32 %v242, 4294901760
    %v244 = vsub.f32 %v242, %v243
    %v245 = vand.u32 %v244, 4294901760
    %246 = vmatmul.mubr.f32.gmra.mrb[0].mxu0 %v245
    %v247 = vpop.f32.mrb[0].mxu0
    %v248 = vadd.f32 0.0, %v247
    %v249 = vpop.f32.mrb[0].mxu0
    %250 = vmatprep.mubr.f32.mxu0 0.0
    %v251 = vand.u32 %v126, 4294901760
    %v252 = vsub.f32 %v126, %v251
    %v253 = vand.u32 %v252, 4294901760
    %v254 = vsub.f32 %v252, %v253
    %v255 = vand.u32 %v254, 4294901760
    %256 = vmatmul.mubr.f32.gmra.mrb[0].mxu0 %v255
    %v257 = vpop.f32.mrb[0].mxu0
    %v258 = vadd.f32 0.0, %v257
    %v259 = vpop.f32.mrb[0].mxu0
    %260 = vmatprep.mubr.f32.mxu0 0.0
    %v261 = vand.u32 %v127, 4294901760
    %v262 = vsub.f32 %v127, %v261
    %v263 = vand.u32 %v262, 4294901760
    %v264 = vsub.f32 %v262, %v263
    %v265 = vand.u32 %v264, 4294901760
    %266 = vmatmul.mubr.f32.gmra.mrb[0].mxu0 %v265
    %v267 = vpop.f32.mrb[0].mxu0
    %v268 = vadd.f32 0.0, %v267
    %v269 = vpop.f32.mrb[0].mxu0
    %270 = vmatprep.mubr.f32.mxu0 0.0
    %v271 = vand.u32 %v128, 4294901760
    %v272 = vsub.f32 %v128, %v271
    %v273 = vand.u32 %v272, 4294901760
    %v274 = vsub.f32 %v272, %v273
    %v275 = vand.u32 %v274, 4294901760
    %276 = vmatmul.mubr.f32.gmra.mrb[0].mxu0 %v275
    %v277 = vpop.f32.mrb[0].mxu0
    %v278 = vadd.f32 0.0, %v277
    %v279 = vpop.f32.mrb[0].mxu0
    %280 = vmatprep.mubr.f32.mxu0 0.0
    %v281 = vand.u32 %v129, 4294901760
    %v282 = vsub.f32 %v129, %v281
    %v283 = vand.u32 %v282, 4294901760
    %v284 = vsub.f32 %v282, %v283
    %v285 = vand.u32 %v284, 4294901760
    %286 = vmatmul.mubr.f32.gmra.mrb[0].mxu0 %v285
    %v287 = vpop.f32.mrb[0].mxu0
    %v288 = vadd.f32 0.0, %v287
    %v289 = vpop.f32.mrb[0].mxu0
    %290 = vdwg.mxu0
    %291 = vmatprep.subr.mxu0 0.0
    %v292 = vand.u32 %v90, 4294901760
    %v293 = vsub.f32 %v90, %v292
    %v294 = vand.u32 %v293, 4294901760
    %v295 = vsub.f32 %v293, %v294
    %v296 = vand.u32 %v295, 4294901760
    %297 = vmatpush1.msra.mxu0 %v296
    %298 = vmatprep.subr.mxu0 0.0
    %v299 = vand.u32 %v91, 4294901760
    %v300 = vsub.f32 %v91, %v299
    %v301 = vand.u32 %v300, 4294901760
    %v302 = vsub.f32 %v300, %v301
    %v303 = vand.u32 %v302, 4294901760
    %304 = vmatpush1.msra.mxu0 %v303
    %305 = vmatprep.subr.mxu0 0.0
    %v306 = vand.u32 %v92, 4294901760
    %v307 = vsub.f32 %v92, %v306
    %v308 = vand.u32 %v307, 4294901760
    %v309 = vsub.f32 %v307, %v308
    %v310 = vand.u32 %v309, 4294901760
    %311 = vmatpush1.msra.mxu0 %v310
    %312 = vmatprep.subr.mxu0 0.0
    %v313 = vand.u32 %v93, 4294901760
    %v314 = vsub.f32 %v93, %v313
    %v315 = vand.u32 %v314, 4294901760
    %v316 = vsub.f32 %v314, %v315
    %v317 = vand.u32 %v316, 4294901760
    %318 = vmatpush1.msra.mxu0 %v317
    %319 = vmatprep.subr.mxu0 0.0
    %v320 = vand.u32 %v94, 4294901760
    %v321 = vsub.f32 %v94, %v320
    %v322 = vand.u32 %v321, 4294901760
    %v323 = vsub.f32 %v321, %v322
    %v324 = vand.u32 %v323, 4294901760
    %325 = vmatpush1.msra.mxu0 %v324
    %326 = vmatprep.subr.mxu0 0.0
    %v327 = vand.u32 %v95, 4294901760
    %v328 = vsub.f32 %v95, %v327
    %v329 = vand.u32 %v328, 4294901760
    %v330 = vsub.f32 %v328, %v329
    %v331 = vand.u32 %v330, 4294901760
    %332 = vmatpush1.msra.mxu0 %v331
    %333 = vmatprep.subr.mxu0 0.0
    %v334 = vand.u32 %v96, 4294901760
    %v335 = vsub.f32 %v96, %v334
    %v336 = vand.u32 %v335, 4294901760
    %v337 = vsub.f32 %v335, %v336
    %v338 = vand.u32 %v337, 4294901760
    %339 = vmatpush1.msra.mxu0 %v338
    %340 = vmatprep.subr.mxu0 0.0
    %v341 = vand.u32 %v97, 4294901760
    %v342 = vsub.f32 %v97, %v341
    %v343 = vand.u32 %v342, 4294901760
    %v344 = vsub.f32 %v342, %v343
    %v345 = vand.u32 %v344, 4294901760
    %346 = vmatpush1.msra.mxu0 %v345
    %347 = vmatprep.subr.mxu0 0.0
    %v348 = vand.u32 %v98, 4294901760
    %v349 = vsub.f32 %v98, %v348
    %v350 = vand.u32 %v349, 4294901760
    %v351 = vsub.f32 %v349, %v350
    %v352 = vand.u32 %v351, 4294901760
    %353 = vmatpush1.msra.mxu0 %v352
    %354 = vmatprep.subr.mxu0 0.0
    %v355 = vand.u32 %v99, 4294901760
    %v356 = vsub.f32 %v99, %v355
    %v357 = vand.u32 %v356, 4294901760
    %v358 = vsub.f32 %v356, %v357
    %v359 = vand.u32 %v358, 4294901760
    %360 = vmatpush1.msra.mxu0 %v359
    %361 = vmatprep.subr.mxu0 0.0
    %v362 = vand.u32 %v100, 4294901760
    %v363 = vsub.f32 %v100, %v362
    %v364 = vand.u32 %v363, 4294901760
    %v365 = vsub.f32 %v363, %v364
    %v366 = vand.u32 %v365, 4294901760
    %367 = vmatpush1.msra.mxu0 %v366
    %368 = vmatprep.subr.mxu0 0.0
    %v369 = vand.u32 %v101, 4294901760
    %v370 = vsub.f32 %v101, %v369
    %v371 = vand.u32 %v370, 4294901760
    %v372 = vsub.f32 %v370, %v371
    %v373 = vand.u32 %v372, 4294901760
    %374 = vmatpush1.msra.mxu0 %v373
    %375 = vmatprep.subr.mxu0 0.0
    %v376 = vand.u32 %v102, 4294901760
    %v377 = vsub.f32 %v102, %v376
    %v378 = vand.u32 %v377, 4294901760
    %v379 = vsub.f32 %v377, %v378
    %v380 = vand.u32 %v379, 4294901760
    %381 = vmatpush1.msra.mxu0 %v380
    %382 = vmatprep.subr.mxu0 0.0
    %v383 = vand.u32 %v103, 4294901760
    %v384 = vsub.f32 %v103, %v383
    %v385 = vand.u32 %v384, 4294901760
    %v386 = vsub.f32 %v384, %v385
    %v387 = vand.u32 %v386, 4294901760
    %388 = vmatpush1.msra.mxu0 %v387
    %389 = vmatprep.subr.mxu0 0.0
    %v390 = vand.u32 %v104, 4294901760
    %v391 = vsub.f32 %v104, %v390
    %v392 = vand.u32 %v391, 4294901760
    %v393 = vsub.f32 %v391, %v392
    %v394 = vand.u32 %v393, 4294901760
    %395 = vmatpush1.msra.mxu0 %v394
    %396 = vmatprep.subr.mxu0 0.0
    %v397 = vand.u32 %v105, 4294901760
    %v398 = vsub.f32 %v105, %v397
    %v399 = vand.u32 %v398, 4294901760
    %v400 = vsub.f32 %v398, %v399
    %v401 = vand.u32 %v400, 4294901760
    %402 = vmatpush1.msra.mxu0 %v401
    %403 = vmatprep.subr.mxu0 0.0
    %404 = vmatpush1.msra.mxu0 0.0
    %405 = vmatprep.subr.mxu0 0.0
    %406 = vmatpush1.msra.mxu0 0.0
    %407 = vmatprep.subr.mxu0 0.0
    %408 = vmatpush1.msra.mxu0 0.0
    %409 = vmatprep.subr.mxu0 0.0
    %410 = vmatpush1.msra.mxu0 0.0
    %411 = vmatprep.subr.mxu0 0.0
    %412 = vmatpush1.msra.mxu0 0.0
    %413 = vmatprep.subr.mxu0 0.0
    %414 = vmatpush1.msra.mxu0 0.0
    %415 = vmatprep.subr.mxu0 0.0
    %416 = vmatpush1.msra.mxu0 0.0
    %417 = vmatprep.subr.mxu0 0.0
    %418 = vmatpush1.msra.mxu0 0.0
    %419 = vmatprep.subr.mxu0 0.0
    %420 = vmatpush1.msra.mxu0 0.0
    %421 = vmatprep.subr.mxu0 0.0
    %422 = vmatpush1.msra.mxu0 0.0
    %423 = vmatprep.subr.mxu0 0.0
    %424 = vmatpush1.msra.mxu0 0.0
    %425 = vmatprep.subr.mxu0 0.0
    %426 = vmatpush1.msra.mxu0 0.0
    %427 = vmatprep.subr.mxu0 0.0
    %428 = vmatpush1.msra.mxu0 0.0
    %429 = vmatprep.subr.mxu0 0.0
    %430 = vmatpush1.msra.mxu0 0.0
    %431 = vmatprep.subr.mxu0 0.0
    %432 = vmatpush1.msra.mxu0 0.0
    %433 = vmatprep.subr.mxu0 0.0
    %434 = vmatpush1.msra.mxu0 0.0
    %435 = vmatprep.mubr.f32.mxu0 0.0
    %v436 = vand.u32 %v122, 4294901760
    %437 = vmatmul.mubr.f32.gmra.mrb[0].mxu0 %v436
    %v438 = vpop.f32.mrb[0].mxu0
    %v439 = vadd.f32 %v218, %v438
    %v440 = vpop.f32.mrb[0].mxu0
    %441 = vmatprep.mubr.f32.mxu0 0.0
    %v442 = vand.u32 %v123, 4294901760
    %443 = vmatmul.mubr.f32.gmra.mrb[0].mxu0 %v442
    %v444 = vpop.f32.mrb[0].mxu0
    %v445 = vadd.f32 %v228, %v444
    %v446 = vpop.f32.mrb[0].mxu0
    %447 = vmatprep.mubr.f32.mxu0 0.0
    %v448 = vand.u32 %v124, 4294901760
    %449 = vmatmul.mubr.f32.gmra.mrb[0].mxu0 %v448
    %v450 = vpop.f32.mrb[0].mxu0
    %v451 = vadd.f32 %v238, %v450
    %v452 = vpop.f32.mrb[0].mxu0
    %453 = vmatprep.mubr.f32.mxu0 0.0
    %v454 = vand.u32 %v125, 4294901760
    %455 = vmatmul.mubr.f32.gmra.mrb[0].mxu0 %v454
    %v456 = vpop.f32.mrb[0].mxu0
    %v457 = vadd.f32 %v248, %v456
    %v458 = vpop.f32.mrb[0].mxu0
    %459 = vmatprep.mubr.f32.mxu0 0.0
    %v460 = vand.u32 %v126, 4294901760
    %461 = vmatmul.mubr.f32.gmra.mrb[0].mxu0 %v460
    %v462 = vpop.f32.mrb[0].mxu0
    %v463 = vadd.f32 %v258, %v462
    %v464 = vpop.f32.mrb[0].mxu0
    %465 = vmatprep.mubr.f32.mxu0 0.0
    %v466 = vand.u32 %v127, 4294901760
    %467 = vmatmul.mubr.f32.gmra.mrb[0].mxu0 %v466
    %v468 = vpop.f32.mrb[0].mxu0
    %v469 = vadd.f32 %v268, %v468
    %v470 = vpop.f32.mrb[0].mxu0
    %471 = vmatprep.mubr.f32.mxu0 0.0
    %v472 = vand.u32 %v128, 4294901760
    %473 = vmatmul.mubr.f32.gmra.mrb[0].mxu0 %v472
    %v474 = vpop.f32.mrb[0].mxu0
    %v475 = vadd.f32 %v278, %v474
    %v476 = vpop.f32.mrb[0].mxu0
    %477 = vmatprep.mubr.f32.mxu0 0.0
    %v478 = vand.u32 %v129, 4294901760
    %479 = vmatmul.mubr.f32.gmra.mrb[0].mxu0 %v478
    %v480 = vpop.f32.mrb[0].mxu0
    %v481 = vadd.f32 %v288, %v480
    %v482 = vpop.f32.mrb[0].mxu0
    %483 = vdwg.mxu0
    %484 = vmatprep.subr.mxu0 0.0
    %v485 = vand.u32 %v90, 4294901760
    %v486 = vsub.f32 %v90, %v485
    %487 = vmatpush1.msra.mxu0 %v486
    %488 = vmatprep.subr.mxu0 0.0
    %v489 = vand.u32 %v91, 4294901760
    %v490 = vsub.f32 %v91, %v489
    %491 = vmatpush1.msra.mxu0 %v490
    %492 = vmatprep.subr.mxu0 0.0
    %v493 = vand.u32 %v92, 4294901760
    %v494 = vsub.f32 %v92, %v493
    %495 = vmatpush1.msra.mxu0 %v494
    %496 = vmatprep.subr.mxu0 0.0
    %v497 = vand.u32 %v93, 4294901760
    %v498 = vsub.f32 %v93, %v497
    %499 = vmatpush1.msra.mxu0 %v498
    %500 = vmatprep.subr.mxu0 0.0
    %v501 = vand.u32 %v94, 4294901760
    %v502 = vsub.f32 %v94, %v501
    %503 = vmatpush1.msra.mxu0 %v502
    %504 = vmatprep.subr.mxu0 0.0
    %v505 = vand.u32 %v95, 4294901760
    %v506 = vsub.f32 %v95, %v505
    %507 = vmatpush1.msra.mxu0 %v506
    %508 = vmatprep.subr.mxu0 0.0
    %v509 = vand.u32 %v96, 4294901760
    %v510 = vsub.f32 %v96, %v509
    %511 = vmatpush1.msra.mxu0 %v510
    %512 = vmatprep.subr.mxu0 0.0
    %v513 = vand.u32 %v97, 4294901760
    %v514 = vsub.f32 %v97, %v513
    %515 = vmatpush1.msra.mxu0 %v514
    %516 = vmatprep.subr.mxu0 0.0
    %v517 = vand.u32 %v98, 4294901760
    %v518 = vsub.f32 %v98, %v517
    %519 = vmatpush1.msra.mxu0 %v518
    %520 = vmatprep.subr.mxu0 0.0
    %v521 = vand.u32 %v99, 4294901760
    %v522 = vsub.f32 %v99, %v521
    %523 = vmatpush1.msra.mxu0 %v522
    %524 = vmatprep.subr.mxu0 0.0
    %v525 = vand.u32 %v100, 4294901760
    %v526 = vsub.f32 %v100, %v525
    %527 = vmatpush1.msra.mxu0 %v526
    %528 = vmatprep.subr.mxu0 0.0
    %v529 = vand.u32 %v101, 4294901760
    %v530 = vsub.f32 %v101, %v529
    %531 = vmatpush1.msra.mxu0 %v530
    %532 = vmatprep.subr.mxu0 0.0
    %v533 = vand.u32 %v102, 4294901760
    %v534 = vsub.f32 %v102, %v533
    %535 = vmatpush1.msra.mxu0 %v534
    %536 = vmatprep.subr.mxu0 0.0
    %v537 = vand.u32 %v103, 4294901760
    %v538 = vsub.f32 %v103, %v537
    %539 = vmatpush1.msra.mxu0 %v538
    %540 = vmatprep.subr.mxu0 0.0
    %v541 = vand.u32 %v104, 4294901760
    %v542 = vsub.f32 %v104, %v541
    %543 = vmatpush1.msra.mxu0 %v542
    %544 = vmatprep.subr.mxu0 0.0
    %v545 = vand.u32 %v105, 4294901760
    %v546 = vsub.f32 %v105, %v545
    %547 = vmatpush1.msra.mxu0 %v546
    %548 = vmatprep.subr.mxu0 0.0
    %549 = vmatpush1.msra.mxu0 0.0
    %550 = vmatprep.subr.mxu0 0.0
    %551 = vmatpush1.msra.mxu0 0.0
    %552 = vmatprep.subr.mxu0 0.0
    %553 = vmatpush1.msra.mxu0 0.0
    %554 = vmatprep.subr.mxu0 0.0
    %555 = vmatpush1.msra.mxu0 0.0
    %556 = vmatprep.subr.mxu0 0.0
    %557 = vmatpush1.msra.mxu0 0.0
    %558 = vmatprep.subr.mxu0 0.0
    %559 = vmatpush1.msra.mxu0 0.0
    %560 = vmatprep.subr.mxu0 0.0
    %561 = vmatpush1.msra.mxu0 0.0
    %562 = vmatprep.subr.mxu0 0.0
    %563 = vmatpush1.msra.mxu0 0.0
    %564 = vmatprep.subr.mxu0 0.0
    %565 = vmatpush1.msra.mxu0 0.0
    %566 = vmatprep.subr.mxu0 0.0
    %567 = vmatpush1.msra.mxu0 0.0
    %568 = vmatprep.subr.mxu0 0.0
    %569 = vmatpush1.msra.mxu0 0.0
    %570 = vmatprep.subr.mxu0 0.0
    %571 = vmatpush1.msra.mxu0 0.0
    %572 = vmatprep.subr.mxu0 0.0
    %573 = vmatpush1.msra.mxu0 0.0
    %574 = vmatprep.subr.mxu0 0.0
    %575 = vmatpush1.msra.mxu0 0.0
    %576 = vmatprep.subr.mxu0 0.0
    %577 = vmatpush1.msra.mxu0 0.0
    %578 = vmatprep.subr.mxu0 0.0
    %579 = vmatpush1.msra.mxu0 0.0
    %580 = vmatprep.mubr.f32.mxu0 0.0
    %v581 = vand.u32 %v122, 4294901760
    %v582 = vsub.f32 %v122, %v581
    %583 = vmatmul.mubr.f32.gmra.mrb[0].mxu0 %v582
    %v584 = vpop.f32.mrb[0].mxu0
    %v585 = vadd.f32 %v439, %v584
    %v586 = vpop.f32.mrb[0].mxu0
    %587 = vmatprep.mubr.f32.mxu0 0.0
    %v588 = vand.u32 %v123, 4294901760
    %v589 = vsub.f32 %v123, %v588
    %590 = vmatmul.mubr.f32.gmra.mrb[0].mxu0 %v589
    %v591 = vpop.f32.mrb[0].mxu0
    %v592 = vadd.f32 %v445, %v591
    %v593 = vpop.f32.mrb[0].mxu0
    %594 = vmatprep.mubr.f32.mxu0 0.0
    %v595 = vand.u32 %v124, 4294901760
    %v596 = vsub.f32 %v124, %v595
    %597 = vmatmul.mubr.f32.gmra.mrb[0].mxu0 %v596
    %v598 = vpop.f32.mrb[0].mxu0
    %v599 = vadd.f32 %v451, %v598
    %v600 = vpop.f32.mrb[0].mxu0
    %601 = vmatprep.mubr.f32.mxu0 0.0
    %v602 = vand.u32 %v125, 4294901760
    %v603 = vsub.f32 %v125, %v602
    %604 = vmatmul.mubr.f32.gmra.mrb[0].mxu0 %v603
    %v605 = vpop.f32.mrb[0].mxu0
    %v606 = vadd.f32 %v457, %v605
    %v607 = vpop.f32.mrb[0].mxu0
    %608 = vmatprep.mubr.f32.mxu0 0.0
    %v609 = vand.u32 %v126, 4294901760
    %v610 = vsub.f32 %v126, %v609
    %611 = vmatmul.mubr.f32.gmra.mrb[0].mxu0 %v610
    %v612 = vpop.f32.mrb[0].mxu0
    %v613 = vadd.f32 %v463, %v612
    %v614 = vpop.f32.mrb[0].mxu0
    %615 = vmatprep.mubr.f32.mxu0 0.0
    %v616 = vand.u32 %v127, 4294901760
    %v617 = vsub.f32 %v127, %v616
    %618 = vmatmul.mubr.f32.gmra.mrb[0].mxu0 %v617
    %v619 = vpop.f32.mrb[0].mxu0
    %v620 = vadd.f32 %v469, %v619
    %v621 = vpop.f32.mrb[0].mxu0
    %622 = vmatprep.mubr.f32.mxu0 0.0
    %v623 = vand.u32 %v128, 4294901760
    %v624 = vsub.f32 %v128, %v623
    %625 = vmatmul.mubr.f32.gmra.mrb[0].mxu0 %v624
    %v626 = vpop.f32.mrb[0].mxu0
    %v627 = vadd.f32 %v475, %v626
    %v628 = vpop.f32.mrb[0].mxu0
    %629 = vmatprep.mubr.f32.mxu0 0.0
    %v630 = vand.u32 %v129, 4294901760
    %v631 = vsub.f32 %v129, %v630
    %632 = vmatmul.mubr.f32.gmra.mrb[0].mxu0 %v631
    %v633 = vpop.f32.mrb[0].mxu0
    %v634 = vadd.f32 %v481, %v633
    %v635 = vpop.f32.mrb[0].mxu0
    %636 = vdwg.mxu0
    %637 = vmatprep.subr.mxu0 0.0
    %v638 = vand.u32 %v90, 4294901760
    %639 = vmatpush1.msra.mxu0 %v638
    %640 = vmatprep.subr.mxu0 0.0
    %v641 = vand.u32 %v91, 4294901760
    %642 = vmatpush1.msra.mxu0 %v641
    %643 = vmatprep.subr.mxu0 0.0
    %v644 = vand.u32 %v92, 4294901760
    %645 = vmatpush1.msra.mxu0 %v644
    %646 = vmatprep.subr.mxu0 0.0
    %v647 = vand.u32 %v93, 4294901760
    %648 = vmatpush1.msra.mxu0 %v647
    %649 = vmatprep.subr.mxu0 0.0
    %v650 = vand.u32 %v94, 4294901760
    %651 = vmatpush1.msra.mxu0 %v650
    %652 = vmatprep.subr.mxu0 0.0
    %v653 = vand.u32 %v95, 4294901760
    %654 = vmatpush1.msra.mxu0 %v653
    %655 = vmatprep.subr.mxu0 0.0
    %v656 = vand.u32 %v96, 4294901760
    %657 = vmatpush1.msra.mxu0 %v656
    %658 = vmatprep.subr.mxu0 0.0
    %v659 = vand.u32 %v97, 4294901760
    %660 = vmatpush1.msra.mxu0 %v659
    %661 = vmatprep.subr.mxu0 0.0
    %v662 = vand.u32 %v98, 4294901760
    %663 = vmatpush1.msra.mxu0 %v662
    %664 = vmatprep.subr.mxu0 0.0
    %v665 = vand.u32 %v99, 4294901760
    %666 = vmatpush1.msra.mxu0 %v665
    %667 = vmatprep.subr.mxu0 0.0
    %v668 = vand.u32 %v100, 4294901760
    %669 = vmatpush1.msra.mxu0 %v668
    %670 = vmatprep.subr.mxu0 0.0
    %v671 = vand.u32 %v101, 4294901760
    %672 = vmatpush1.msra.mxu0 %v671
    %673 = vmatprep.subr.mxu0 0.0
    %v674 = vand.u32 %v102, 4294901760
    %675 = vmatpush1.msra.mxu0 %v674
    %676 = vmatprep.subr.mxu0 0.0
    %v677 = vand.u32 %v103, 4294901760
    %678 = vmatpush1.msra.mxu0 %v677
    %679 = vmatprep.subr.mxu0 0.0
    %v680 = vand.u32 %v104, 4294901760
    %681 = vmatpush1.msra.mxu0 %v680
    %682 = vmatprep.subr.mxu0 0.0
    %v683 = vand.u32 %v105, 4294901760
    %684 = vmatpush1.msra.mxu0 %v683
    %685 = vmatprep.subr.mxu0 0.0
    %686 = vmatpush1.msra.mxu0 0.0
    %687 = vmatprep.subr.mxu0 0.0
    %688 = vmatpush1.msra.mxu0 0.0
    %689 = vmatprep.subr.mxu0 0.0
    %690 = vmatpush1.msra.mxu0 0.0
    %691 = vmatprep.subr.mxu0 0.0
    %692 = vmatpush1.msra.mxu0 0.0
    %693 = vmatprep.subr.mxu0 0.0
    %694 = vmatpush1.msra.mxu0 0.0
    %695 = vmatprep.subr.mxu0 0.0
    %696 = vmatpush1.msra.mxu0 0.0
    %697 = vmatprep.subr.mxu0 0.0
    %698 = vmatpush1.msra.mxu0 0.0
    %699 = vmatprep.subr.mxu0 0.0
    %700 = vmatpush1.msra.mxu0 0.0
    %701 = vmatprep.subr.mxu0 0.0
    %702 = vmatpush1.msra.mxu0 0.0
    %703 = vmatprep.subr.mxu0 0.0
    %704 = vmatpush1.msra.mxu0 0.0
    %705 = vmatprep.subr.mxu0 0.0
    %706 = vmatpush1.msra.mxu0 0.0
    %707 = vmatprep.subr.mxu0 0.0
    %708 = vmatpush1.msra.mxu0 0.0
    %709 = vmatprep.subr.mxu0 0.0
    %710 = vmatpush1.msra.mxu0 0.0
    %711 = vmatprep.subr.mxu0 0.0
    %712 = vmatpush1.msra.mxu0 0.0
    %713 = vmatprep.subr.mxu0 0.0
    %714 = vmatpush1.msra.mxu0 0.0
    %715 = vmatprep.subr.mxu0 0.0
    %716 = vmatpush1.msra.mxu0 0.0
    %717 = vmatprep.mubr.f32.mxu0 0.0
    %v718 = vand.u32 %v122, 4294901760
    %v719 = vsub.f32 %v122, %v718
    %v720 = vand.u32 %v719, 4294901760
    %721 = vmatmul.mubr.f32.gmra.mrb[0].mxu0 %v720
    %v722 = vpop.f32.mrb[0].mxu0
    %v723 = vadd.f32 %v585, %v722
    %v724 = vpop.f32.mrb[0].mxu0
    %725 = vmatprep.mubr.f32.mxu0 0.0
    %v726 = vand.u32 %v123, 4294901760
    %v727 = vsub.f32 %v123, %v726
    %v728 = vand.u32 %v727, 4294901760
    %729 = vmatmul.mubr.f32.gmra.mrb[0].mxu0 %v728
    %v730 = vpop.f32.mrb[0].mxu0
    %v731 = vadd.f32 %v592, %v730
    %v732 = vpop.f32.mrb[0].mxu0
    %733 = vmatprep.mubr.f32.mxu0 0.0
    %v734 = vand.u32 %v124, 4294901760
    %v735 = vsub.f32 %v124, %v734
    %v736 = vand.u32 %v735, 4294901760
    %737 = vmatmul.mubr.f32.gmra.mrb[0].mxu0 %v736
    %v738 = vpop.f32.mrb[0].mxu0
    %v739 = vadd.f32 %v599, %v738
    %v740 = vpop.f32.mrb[0].mxu0
    %741 = vmatprep.mubr.f32.mxu0 0.0
    %v742 = vand.u32 %v125, 4294901760
    %v743 = vsub.f32 %v125, %v742
    %v744 = vand.u32 %v743, 4294901760
    %745 = vmatmul.mubr.f32.gmra.mrb[0].mxu0 %v744
    %v746 = vpop.f32.mrb[0].mxu0
    %v747 = vadd.f32 %v606, %v746
    %v748 = vpop.f32.mrb[0].mxu0
    %749 = vmatprep.mubr.f32.mxu0 0.0
    %v750 = vand.u32 %v126, 4294901760
    %v751 = vsub.f32 %v126, %v750
    %v752 = vand.u32 %v751, 4294901760
    %753 = vmatmul.mubr.f32.gmra.mrb[0].mxu0 %v752
    %v754 = vpop.f32.mrb[0].mxu0
    %v755 = vadd.f32 %v613, %v754
    %v756 = vpop.f32.mrb[0].mxu0
    %757 = vmatprep.mubr.f32.mxu0 0.0
    %v758 = vand.u32 %v127, 4294901760
    %v759 = vsub.f32 %v127, %v758
    %v760 = vand.u32 %v759, 4294901760
    %761 = vmatmul.mubr.f32.gmra.mrb[0].mxu0 %v760
    %v762 = vpop.f32.mrb[0].mxu0
    %v763 = vadd.f32 %v620, %v762
    %v764 = vpop.f32.mrb[0].mxu0
    %765 = vmatprep.mubr.f32.mxu0 0.0
    %v766 = vand.u32 %v128, 4294901760
    %v767 = vsub.f32 %v128, %v766
    %v768 = vand.u32 %v767, 4294901760
    %769 = vmatmul.mubr.f32.gmra.mrb[0].mxu0 %v768
    %v770 = vpop.f32.mrb[0].mxu0
    %v771 = vadd.f32 %v627, %v770
    %v772 = vpop.f32.mrb[0].mxu0
    %773 = vmatprep.mubr.f32.mxu0 0.0
    %v774 = vand.u32 %v129, 4294901760
    %v775 = vsub.f32 %v129, %v774
    %v776 = vand.u32 %v775, 4294901760
    %777 = vmatmul.mubr.f32.gmra.mrb[0].mxu0 %v776
    %v778 = vpop.f32.mrb[0].mxu0
    %v779 = vadd.f32 %v634, %v778
    %v780 = vpop.f32.mrb[0].mxu0
    %781 = vdwg.mxu0
    %782 = vmatprep.subr.mxu0 0.0
    %v783 = vand.u32 %v90, 4294901760
    %v784 = vsub.f32 %v90, %v783
    %v785 = vand.u32 %v784, 4294901760
    %786 = vmatpush1.msra.mxu0 %v785
    %787 = vmatprep.subr.mxu0 0.0
    %v788 = vand.u32 %v91, 4294901760
    %v789 = vsub.f32 %v91, %v788
    %v790 = vand.u32 %v789, 4294901760
    %791 = vmatpush1.msra.mxu0 %v790
    %792 = vmatprep.subr.mxu0 0.0
    %v793 = vand.u32 %v92, 4294901760
    %v794 = vsub.f32 %v92, %v793
    %v795 = vand.u32 %v794, 4294901760
    %796 = vmatpush1.msra.mxu0 %v795
    %797 = vmatprep.subr.mxu0 0.0
    %v798 = vand.u32 %v93, 4294901760
    %v799 = vsub.f32 %v93, %v798
    %v800 = vand.u32 %v799, 4294901760
    %801 = vmatpush1.msra.mxu0 %v800
    %802 = vmatprep.subr.mxu0 0.0
    %v803 = vand.u32 %v94, 4294901760
    %v804 = vsub.f32 %v94, %v803
    %v805 = vand.u32 %v804, 4294901760
    %806 = vmatpush1.msra.mxu0 %v805
    %807 = vmatprep.subr.mxu0 0.0
    %v808 = vand.u32 %v95, 4294901760
    %v809 = vsub.f32 %v95, %v808
    %v810 = vand.u32 %v809, 4294901760
    %811 = vmatpush1.msra.mxu0 %v810
    %812 = vmatprep.subr.mxu0 0.0
    %v813 = vand.u32 %v96, 4294901760
    %v814 = vsub.f32 %v96, %v813
    %v815 = vand.u32 %v814, 4294901760
    %816 = vmatpush1.msra.mxu0 %v815
    %817 = vmatprep.subr.mxu0 0.0
    %v818 = vand.u32 %v97, 4294901760
    %v819 = vsub.f32 %v97, %v818
    %v820 = vand.u32 %v819, 4294901760
    %821 = vmatpush1.msra.mxu0 %v820
    %822 = vmatprep.subr.mxu0 0.0
    %v823 = vand.u32 %v98, 4294901760
    %v824 = vsub.f32 %v98, %v823
    %v825 = vand.u32 %v824, 4294901760
    %826 = vmatpush1.msra.mxu0 %v825
    %827 = vmatprep.subr.mxu0 0.0
    %v828 = vand.u32 %v99, 4294901760
    %v829 = vsub.f32 %v99, %v828
    %v830 = vand.u32 %v829, 4294901760
    %831 = vmatpush1.msra.mxu0 %v830
    %832 = vmatprep.subr.mxu0 0.0
    %v833 = vand.u32 %v100, 4294901760
    %v834 = vsub.f32 %v100, %v833
    %v835 = vand.u32 %v834, 4294901760
    %836 = vmatpush1.msra.mxu0 %v835
    %837 = vmatprep.subr.mxu0 0.0
    %v838 = vand.u32 %v101, 4294901760
    %v839 = vsub.f32 %v101, %v838
    %v840 = vand.u32 %v839, 4294901760
    %841 = vmatpush1.msra.mxu0 %v840
    %842 = vmatprep.subr.mxu0 0.0
    %v843 = vand.u32 %v102, 4294901760
    %v844 = vsub.f32 %v102, %v843
    %v845 = vand.u32 %v844, 4294901760
    %846 = vmatpush1.msra.mxu0 %v845
    %847 = vmatprep.subr.mxu0 0.0
    %v848 = vand.u32 %v103, 4294901760
    %v849 = vsub.f32 %v103, %v848
    %v850 = vand.u32 %v849, 4294901760
    %851 = vmatpush1.msra.mxu0 %v850
    %852 = vmatprep.subr.mxu0 0.0
    %v853 = vand.u32 %v104, 4294901760
    %v854 = vsub.f32 %v104, %v853
    %v855 = vand.u32 %v854, 4294901760
    %856 = vmatpush1.msra.mxu0 %v855
    %857 = vmatprep.subr.mxu0 0.0
    %v858 = vand.u32 %v105, 4294901760
    %v859 = vsub.f32 %v105, %v858
    %v860 = vand.u32 %v859, 4294901760
    %861 = vmatpush1.msra.mxu0 %v860
    %862 = vmatprep.subr.mxu0 0.0
    %863 = vmatpush1.msra.mxu0 0.0
    %864 = vmatprep.subr.mxu0 0.0
    %865 = vmatpush1.msra.mxu0 0.0
    %866 = vmatprep.subr.mxu0 0.0
    %867 = vmatpush1.msra.mxu0 0.0
    %868 = vmatprep.subr.mxu0 0.0
    %869 = vmatpush1.msra.mxu0 0.0
    %870 = vmatprep.subr.mxu0 0.0
    %871 = vmatpush1.msra.mxu0 0.0
    %872 = vmatprep.subr.mxu0 0.0
    %873 = vmatpush1.msra.mxu0 0.0
    %874 = vmatprep.subr.mxu0 0.0
    %875 = vmatpush1.msra.mxu0 0.0
    %876 = vmatprep.subr.mxu0 0.0
    %877 = vmatpush1.msra.mxu0 0.0
    %878 = vmatprep.subr.mxu0 0.0
    %879 = vmatpush1.msra.mxu0 0.0
    %880 = vmatprep.subr.mxu0 0.0
    %881 = vmatpush1.msra.mxu0 0.0
    %882 = vmatprep.subr.mxu0 0.0
    %883 = vmatpush1.msra.mxu0 0.0
    %884 = vmatprep.subr.mxu0 0.0
    %885 = vmatpush1.msra.mxu0 0.0
    %886 = vmatprep.subr.mxu0 0.0
    %887 = vmatpush1.msra.mxu0 0.0
    %888 = vmatprep.subr.mxu0 0.0
    %889 = vmatpush1.msra.mxu0 0.0
    %890 = vmatprep.subr.mxu0 0.0
    %891 = vmatpush1.msra.mxu0 0.0
    %892 = vmatprep.subr.mxu0 0.0
    %893 = vmatpush1.msra.mxu0 0.0
    %894 = vmatprep.mubr.f32.mxu0 0.0
    %v895 = vand.u32 %v122, 4294901760
    %896 = vmatmul.mubr.f32.gmra.mrb[0].mxu0 %v895
    %v897 = vpop.f32.mrb[0].mxu0
    %v898 = vadd.f32 %v723, %v897
    %v899 = vpop.f32.mrb[0].mxu0
    %900 = vmatprep.mubr.f32.mxu0 0.0
    %v901 = vand.u32 %v123, 4294901760
    %902 = vmatmul.mubr.f32.gmra.mrb[0].mxu0 %v901
    %v903 = vpop.f32.mrb[0].mxu0
    %v904 = vadd.f32 %v731, %v903
    %v905 = vpop.f32.mrb[0].mxu0
    %906 = vmatprep.mubr.f32.mxu0 0.0
    %v907 = vand.u32 %v124, 4294901760
    %908 = vmatmul.mubr.f32.gmra.mrb[0].mxu0 %v907
    %v909 = vpop.f32.mrb[0].mxu0
    %v910 = vadd.f32 %v739, %v909
    %v911 = vpop.f32.mrb[0].mxu0
    %912 = vmatprep.mubr.f32.mxu0 0.0
    %v913 = vand.u32 %v125, 4294901760
    %914 = vmatmul.mubr.f32.gmra.mrb[0].mxu0 %v913
    %v915 = vpop.f32.mrb[0].mxu0
    %v916 = vadd.f32 %v747, %v915
    %v917 = vpop.f32.mrb[0].mxu0
    %918 = vmatprep.mubr.f32.mxu0 0.0
    %v919 = vand.u32 %v126, 4294901760
    %920 = vmatmul.mubr.f32.gmra.mrb[0].mxu0 %v919
    %v921 = vpop.f32.mrb[0].mxu0
    %v922 = vadd.f32 %v755, %v921
    %v923 = vpop.f32.mrb[0].mxu0
    %924 = vmatprep.mubr.f32.mxu0 0.0
    %v925 = vand.u32 %v127, 4294901760
    %926 = vmatmul.mubr.f32.gmra.mrb[0].mxu0 %v925
    %v927 = vpop.f32.mrb[0].mxu0
    %v928 = vadd.f32 %v763, %v927
    %v929 = vpop.f32.mrb[0].mxu0
    %930 = vmatprep.mubr.f32.mxu0 0.0
    %v931 = vand.u32 %v128, 4294901760
    %932 = vmatmul.mubr.f32.gmra.mrb[0].mxu0 %v931
    %v933 = vpop.f32.mrb[0].mxu0
    %v934 = vadd.f32 %v771, %v933
    %v935 = vpop.f32.mrb[0].mxu0
    %936 = vmatprep.mubr.f32.mxu0 0.0
    %v937 = vand.u32 %v129, 4294901760
    %938 = vmatmul.mubr.f32.gmra.mrb[0].mxu0 %v937
    %v939 = vpop.f32.mrb[0].mxu0
    %v940 = vadd.f32 %v779, %v939
    %v941 = vpop.f32.mrb[0].mxu0
    %942 = vdwg.mxu0
    %943 = vmatprep.subr.mxu0 0.0
    %v944 = vand.u32 %v90, 4294901760
    %945 = vmatpush1.msra.mxu0 %v944
    %946 = vmatprep.subr.mxu0 0.0
    %v947 = vand.u32 %v91, 4294901760
    %948 = vmatpush1.msra.mxu0 %v947
    %949 = vmatprep.subr.mxu0 0.0
    %v950 = vand.u32 %v92, 4294901760
    %951 = vmatpush1.msra.mxu0 %v950
    %952 = vmatprep.subr.mxu0 0.0
    %v953 = vand.u32 %v93, 4294901760
    %954 = vmatpush1.msra.mxu0 %v953
    %955 = vmatprep.subr.mxu0 0.0
    %v956 = vand.u32 %v94, 4294901760
    %957 = vmatpush1.msra.mxu0 %v956
    %958 = vmatprep.subr.mxu0 0.0
    %v959 = vand.u32 %v95, 4294901760
    %960 = vmatpush1.msra.mxu0 %v959
    %961 = vmatprep.subr.mxu0 0.0
    %v962 = vand.u32 %v96, 4294901760
    %963 = vmatpush1.msra.mxu0 %v962
    %964 = vmatprep.subr.mxu0 0.0
    %v965 = vand.u32 %v97, 4294901760
    %966 = vmatpush1.msra.mxu0 %v965
    %967 = vmatprep.subr.mxu0 0.0
    %v968 = vand.u32 %v98, 4294901760
    %969 = vmatpush1.msra.mxu0 %v968
    %970 = vmatprep.subr.mxu0 0.0
    %v971 = vand.u32 %v99, 4294901760
    %972 = vmatpush1.msra.mxu0 %v971
    %973 = vmatprep.subr.mxu0 0.0
    %v974 = vand.u32 %v100, 4294901760
    %975 = vmatpush1.msra.mxu0 %v974
    %976 = vmatprep.subr.mxu0 0.0
    %v977 = vand.u32 %v101, 4294901760
    %978 = vmatpush1.msra.mxu0 %v977
    %979 = vmatprep.subr.mxu0 0.0
    %v980 = vand.u32 %v102, 4294901760
    %981 = vmatpush1.msra.mxu0 %v980
    %982 = vmatprep.subr.mxu0 0.0
    %v983 = vand.u32 %v103, 4294901760
    %984 = vmatpush1.msra.mxu0 %v983
    %985 = vmatprep.subr.mxu0 0.0
    %v986 = vand.u32 %v104, 4294901760
    %987 = vmatpush1.msra.mxu0 %v986
    %988 = vmatprep.subr.mxu0 0.0
    %v989 = vand.u32 %v105, 4294901760
    %990 = vmatpush1.msra.mxu0 %v989
    %991 = vmatprep.subr.mxu0 0.0
    %992 = vmatpush1.msra.mxu0 0.0
    %993 = vmatprep.subr.mxu0 0.0
    %994 = vmatpush1.msra.mxu0 0.0
    %995 = vmatprep.subr.mxu0 0.0
    %996 = vmatpush1.msra.mxu0 0.0
    %997 = vmatprep.subr.mxu0 0.0
    %998 = vmatpush1.msra.mxu0 0.0
    %999 = vmatprep.subr.mxu0 0.0
    %1000 = vmatpush1.msra.mxu0 0.0
    %1001 = vmatprep.subr.mxu0 0.0
    %1002 = vmatpush1.msra.mxu0 0.0
    %1003 = vmatprep.subr.mxu0 0.0
    %1004 = vmatpush1.msra.mxu0 0.0
    %1005 = vmatprep.subr.mxu0 0.0
    %1006 = vmatpush1.msra.mxu0 0.0
    %1007 = vmatprep.subr.mxu0 0.0
    %1008 = vmatpush1.msra.mxu0 0.0
    %1009 = vmatprep.subr.mxu0 0.0
    %1010 = vmatpush1.msra.mxu0 0.0
    %1011 = vmatprep.subr.mxu0 0.0
    %1012 = vmatpush1.msra.mxu0 0.0
    %1013 = vmatprep.subr.mxu0 0.0
    %1014 = vmatpush1.msra.mxu0 0.0
    %1015 = vmatprep.subr.mxu0 0.0
    %1016 = vmatpush1.msra.mxu0 0.0
    %1017 = vmatprep.subr.mxu0 0.0
    %1018 = vmatpush1.msra.mxu0 0.0
    %1019 = vmatprep.subr.mxu0 0.0
    %1020 = vmatpush1.msra.mxu0 0.0
    %1021 = vmatprep.subr.mxu0 0.0
    %1022 = vmatpush1.msra.mxu0 0.0
    %1023 = vmatprep.mubr.f32.mxu0 0.0
    %v1024 = vand.u32 %v122, 4294901760
    %1025 = vmatmul.mubr.f32.gmra.mrb[0].mxu0 %v1024
    %v1026 = vpop.f32.mrb[0].mxu0
    %v1027 = vadd.f32 %v898, %v1026
    %v1028 = vpop.f32.mrb[0].mxu0
    %1029 = vmatprep.mubr.f32.mxu0 0.0
    %v1030 = vand.u32 %v123, 4294901760
    %1031 = vmatmul.mubr.f32.gmra.mrb[0].mxu0 %v1030
    %v1032 = vpop.f32.mrb[0].mxu0
    %v1033 = vadd.f32 %v904, %v1032
    %v1034 = vpop.f32.mrb[0].mxu0
    %1035 = vmatprep.mubr.f32.mxu0 0.0
    %v1036 = vand.u32 %v124, 4294901760
    %1037 = vmatmul.mubr.f32.gmra.mrb[0].mxu0 %v1036
    %v1038 = vpop.f32.mrb[0].mxu0
    %v1039 = vadd.f32 %v910, %v1038
    %v1040 = vpop.f32.mrb[0].mxu0
    %1041 = vmatprep.mubr.f32.mxu0 0.0
    %v1042 = vand.u32 %v125, 4294901760
    %1043 = vmatmul.mubr.f32.gmra.mrb[0].mxu0 %v1042
    %v1044 = vpop.f32.mrb[0].mxu0
    %v1045 = vadd.f32 %v916, %v1044
    %v1046 = vpop.f32.mrb[0].mxu0
    %1047 = vmatprep.mubr.f32.mxu0 0.0
    %v1048 = vand.u32 %v126, 4294901760
    %1049 = vmatmul.mubr.f32.gmra.mrb[0].mxu0 %v1048
    %v1050 = vpop.f32.mrb[0].mxu0
    %v1051 = vadd.f32 %v922, %v1050
    %v1052 = vpop.f32.mrb[0].mxu0
    %1053 = vmatprep.mubr.f32.mxu0 0.0
    %v1054 = vand.u32 %v127, 4294901760
    %1055 = vmatmul.mubr.f32.gmra.mrb[0].mxu0 %v1054
    %v1056 = vpop.f32.mrb[0].mxu0
    %v1057 = vadd.f32 %v928, %v1056
    %v1058 = vpop.f32.mrb[0].mxu0
    %1059 = vmatprep.mubr.f32.mxu0 0.0
    %v1060 = vand.u32 %v128, 4294901760
    %1061 = vmatmul.mubr.f32.gmra.mrb[0].mxu0 %v1060
    %v1062 = vpop.f32.mrb[0].mxu0
    %v1063 = vadd.f32 %v934, %v1062
    %v1064 = vpop.f32.mrb[0].mxu0
    %1065 = vmatprep.mubr.f32.mxu0 0.0
    %v1066 = vand.u32 %v129, 4294901760
    %1067 = vmatmul.mubr.f32.gmra.mrb[0].mxu0 %v1066
    %v1068 = vpop.f32.mrb[0].mxu0
    %v1069 = vadd.f32 %v940, %v1068
    %v1070 = vpop.f32.mrb[0].mxu0
    %1071 = vdwg.mxu0
    %v1072 = vmul.f32 %v1027, %v1027
    %v1073 = vmul.f32 %v1033, %v1033
    %v1074 = vmul.f32 %v1039, %v1039
    %v1075 = vmul.f32 %v1045, %v1045
    %v1076 = vmul.f32 %v1051, %v1051
    %v1077 = vmul.f32 %v1057, %v1057
    %v1078 = vmul.f32 %v1063, %v1063
    %v1079 = vmul.f32 %v1069, %v1069
    %v1080 = vadd.f32 %v1072, 0.0
    %v1081 = vadd.f32 %v1073, 0.0
    %v1082 = vadd.f32 %v1074, 0.0
    %v1083 = vadd.f32 %v1075, 0.0
    %v1084 = vadd.f32 %v1076, 0.0
    %v1085 = vadd.f32 %v1077, 0.0
    %v1086 = vadd.f32 %v1078, 0.0
    %v1087 = vadd.f32 %v1079, 0.0
    %v1088 = vadd.f32 %v1080, %v1081
    %v1089 = vadd.f32 %v1088, %v1082
    %v1090 = vadd.f32 %v1089, %v1083
    %v1091 = vadd.f32 %v1090, %v1084
    %v1092 = vadd.f32 %v1091, %v1085
    %v1093 = vadd.f32 %v1092, %v1086
    %v1094 = vadd.f32 %v1093, %v1087
    %1095 = vadd.xlane.f32.xlu0 %v1094
    %v1096 = vpop.xlane.xlu0 %1095
    %v1097 = vrot.slane %v1096, 4
    %v1098 = vadd.f32 %v1096, %v1097
    %v1099 = vrot.slane %v1098, 2
    %v1100 = vadd.f32 %v1098, %v1099
    %v1101 = vrot.slane %v1100, 1
    %v1102 = vadd.f32 %v1100, %v1101
    %s1103 = vtos %v1102
    %vm1104 = vcmp.eq.s32.totalorder %v40, 0
    %vm1105 = vcmp.eq.s32.totalorder %v57, 0
    %vm1106 = vmand %vm1104, %vm1105
    %v1107 = vstv %s1103
    %v1108 = vsel %vm1106, %v1107, 0.0
    %1109 = vst [vmem:[%s2] sm:$0xff] %v1108
    // Predicated region
    $region18: #{earth_mover_distance_loss.1} parent=1 // pred_check
      _
    $region19: #{earth_mover_distance_loss.1} parent=1 // pred_check_branch
      %1111 = sbr.rel (0) target = $region21
    $region20: #{earth_mover_distance_loss.1} parent=1 // pred_region
      _
    $region21: #{earth_mover_distance_loss.1} parent=1 // pred_fallthru
      _
    // Predicated region
    $region22: #{earth_mover_distance_loss.1} parent=1 // pred_check
      _
    $region23: #{earth_mover_distance_loss.1} parent=1 // pred_check_branch
      %1113 = sbr.rel (0) target = $region25
    $region24: #{earth_mover_distance_loss.1} parent=1 // pred_region
      _
    $region25: #{earth_mover_distance_loss.1} parent=1 // pred_fallthru
      _
    %1114 = vsyncpa [#allocation3], 1
    %1115 = vsyncpa [#allocation5], 1

</llo_original>
